<compile_context>
chip_gen: v5e
topology: v5e:2x2
jax: 0.10.0
libtpu: 0.0.40
codegen_flags: <defaults>
</compile_context>

<pallas_src>
import numpy as np
import jax
import jax.numpy as jnp
from jax import lax
from jax.experimental import pallas as pl
from jax.experimental.pallas import tpu as pltpu

# ---- static config (small shapes consistent with the module) ----------------
N, C_IN, H, W = 2, 4, 16, 16
C_OUT = 8
KH = KW = 3
STRIDE = 1
DILATION = 1
PAD = int(np.ceil((DILATION * (KH - 1) + 1 - STRIDE) / 2.0))  # = 1
H_OUT, W_OUT = H, W                                            # stride 1
BN_EPS = 1e-5

K_DIM = KH * KW * C_IN          # 36  (contraction axis of the im2col matmul)
K_AUG = K_DIM + 1               # 37  (+1 homogeneous row carrying the BN shift)
M_DIM = N * H_OUT * W_OUT       # 512 (lane axis: batch*spatial, multiple of 128)


def conv_bn_relu_kernel(w_ref, p_ref, o_ref):
    """Fused conv + BN + ReLU as one lane-dense MXU matmul.

    w_ref: (C_OUT, K_AUG)   conv weights with BN scale folded in; last column
                            holds the BN shift (matched by the ones-row in p).
    p_ref: (K_AUG, M_DIM)   transposed im2col patches (lanes = N*H*W), last
                            row is all ones.
    o_ref: (C_OUT, M_DIM)   lane-dense output.
    """
    y = jnp.dot(w_ref[...], p_ref[...], preferred_element_type=jnp.float32)
    o_ref[...] = jnp.maximum(y, 0.0).astype(o_ref.dtype)


@jax.jit
def conv_norm_forward(x_nchw, w_oihw, gamma, beta, run_mean, run_var):
    """Wrapper: NCHW in / NCHW out, matching the PyTorch module (eval mode)."""
    x = x_nchw.astype(jnp.float32)
    w = w_oihw.astype(jnp.float32)

    # Fold eval-mode BatchNorm: scale into the weights, shift as an extra column.
    scale = (gamma / jnp.sqrt(run_var + BN_EPS)).astype(jnp.float32)
    shift = (beta - run_mean * scale).astype(jnp.float32)

    # OIHW -> (C_OUT, KH, KW, C_IN) -> (C_OUT, K_DIM); K index order = (kh, kw, ci)
    w2d = jnp.transpose(w, (0, 2, 3, 1)).reshape(C_OUT, K_DIM) * scale[:, None]
    w_aug = jnp.concatenate([w2d, shift[:, None]], axis=1)        # (C_OUT, 37)

    # im2col, transposed so the big N*H*W axis lands on lanes: (K_DIM, M_DIM).
    # K index order (kh, kw, ci) matches the weight reshape above.
    x_pad = jnp.pad(x, ((0, 0), (0, 0), (PAD, PAD), (PAD, PAD)))
    x_cin = jnp.transpose(x_pad, (1, 0, 2, 3))                    # (C_IN, N, H+2, W+2)
    taps = [x_cin[:, :, kh:kh + H_OUT, kw:kw + W_OUT]             # (C_IN, N, H, W)
            for kh in range(KH) for kw in range(KW)]
    p = jnp.stack(taps, axis=0).reshape(K_DIM, M_DIM)             # (36, 512)
    p_aug = jnp.concatenate(
        [p, jnp.ones((1, M_DIM), jnp.float32)], axis=0)           # (37, 512)

    out = pl.pallas_call(
        conv_bn_relu_kernel,
        out_shape=jax.ShapeDtypeStruct((C_OUT, M_DIM), jnp.float32),
        in_specs=[
            pl.BlockSpec(memory_space=pltpu.MemorySpace.VMEM),
            pl.BlockSpec(memory_space=pltpu.MemorySpace.VMEM),
        ],
        out_specs=pl.BlockSpec(memory_space=pltpu.MemorySpace.VMEM),
    )(w_aug, p_aug)

    # (C_OUT, N*H*W) -> (N, C_OUT, H, W)
    return jnp.transpose(out.reshape(C_OUT, N, H_OUT, W_OUT), (1, 0, 2, 3))


def reference_forward(x_nchw, w_oihw, gamma, beta, run_mean, run_var):
    y = lax.conv_general_dilated(
        x_nchw, w_oihw,
        window_strides=(STRIDE, STRIDE),
        padding=((PAD, PAD), (PAD, PAD)),
        rhs_dilation=(DILATION, DILATION),
        dimension_numbers=("NCHW", "OIHW", "NCHW"))
    scale = gamma / jnp.sqrt(run_var + BN_EPS)
    shift = beta - run_mean * scale
    y = y * scale[None, :, None, None] + shift[None, :, None, None]
    return jnp.maximum(y, 0.0)


if __name__ == "__main__":
    key = jax.random.PRNGKey(0)
    kx, kw, kg, kb, km, kv = jax.random.split(key, 6)

    x = jax.random.normal(kx, (N, C_IN, H, W), dtype=jnp.float32)
    # Conv2d weight (C_out, C_in/groups, KH, KW), bias=False
    w = jax.random.normal(kw, (C_OUT, C_IN, KH, KW), dtype=jnp.float32) * 0.1
    # BatchNorm2d affine params / running stats (deterministic synthetic values)
    gamma = 1.0 + 0.1 * jax.random.normal(kg, (C_OUT,), dtype=jnp.float32)
    beta = 0.1 * jax.random.normal(kb, (C_OUT,), dtype=jnp.float32)
    run_mean = 0.1 * jax.random.normal(km, (C_OUT,), dtype=jnp.float32)
    run_var = 1.0 + 0.1 * jax.random.uniform(kv, (C_OUT,), dtype=jnp.float32)

    out = conv_norm_forward(x, w, gamma, beta, run_mean, run_var)
    out = jax.block_until_ready(out)

    ref = reference_forward(x, w, gamma, beta, run_mean, run_var)
    assert out.shape == (N, C_OUT, H_OUT, W_OUT)
    assert jnp.allclose(out, ref, atol=1e-3, rtol=1e-3), "mismatch vs reference"

    print("KERNEL_OK")
</pallas_src>

<mosaic_0001>
module attributes {stable_mosaic.version = 11 : i64} {
  func.func @conv_bn_relu_kernel(%arg0: memref<8x37xf32, #tpu.memory_space<vmem>>, %arg1: memref<37x512xf32, #tpu.memory_space<vmem>>, %arg2: memref<8x512xf32, #tpu.memory_space<vmem>>) attributes {dimension_semantics = [], scalar_prefetch = 0 : i64, scratch_operands = 0 : i64, tpu.core_type = #tpu.core_type<tc>} {
    %c0 = arith.constant 0 : index
    %c0_0 = arith.constant 0 : index
    %0 = vector.load %arg0[%c0, %c0_0] : memref<8x37xf32, #tpu.memory_space<vmem>>, vector<8x37xf32>
    %c0_1 = arith.constant 0 : index
    %c0_2 = arith.constant 0 : index
    %1 = vector.load %arg1[%c0_1, %c0_2] : memref<37x512xf32, #tpu.memory_space<vmem>>, vector<37x512xf32>
    %cst = arith.constant dense<0.000000e+00> : vector<8x512xf32>
    %2 = tpu.matmul %0, %1, %cst {dimension_numbers = #tpu.dot_dimension_numbers<[1], [0], [0], [1], [0, 0, 1, 1], [], []>} : vector<8x37xf32>, vector<37x512xf32>, vector<8x512xf32> -> vector<8x512xf32>
    %cst_3 = arith.constant 0.000000e+00 : f32
    %3 = vector.broadcast %cst_3 : f32 to vector<8x512xf32>
    %4 = arith.maximumf %2, %3 : vector<8x512xf32>
    %c0_4 = arith.constant 0 : index
    %c0_5 = arith.constant 0 : index
    %5 = vector.load %arg2[%c0_4, %c0_5] : memref<8x512xf32, #tpu.memory_space<vmem>>, vector<8x512xf32>
    tpu.vector_store %arg2[%c0_4, %c0_5], %4 {strides = array<i32>} : memref<8x512xf32, #tpu.memory_space<vmem>>, vector<8x512xf32>,
    return
  }
}

</mosaic_0001>

<llo_original>
// kernel: conv_norm_forward.1
$region0: #{conv_norm_forward.1}
  #allocation0 [shape = 'u32[]', space=smem, size = 0x4, offset = 0x4, fixed_abs, tag = 'smem constant byte address 0x4 - core index']
  #allocation1 [shape = 'u32[72,128]{1,0:T(1,128)}', space=vmem, size = 0x9000, scoped, tag = 'internal scratch']
  %s0 = inlined_call_operand.vmem [shape: f32[8,37], index: 0, kind: input, shape index: {}]
  %s1 = inlined_call_operand.vmem [shape: f32[37,512], index: 1, kind: input, shape index: {}]
  %s2 = inlined_call_operand.vmem [shape: f32[8,512], index: 2, kind: output, shape index: {}]
  %s3 = sld [smem:[#allocation0]]
  $region18: #{conv_norm_forward.1} parent=0
    _
  %s5 = ssub.s32 1, %s3
  %s6 = scalar_select 0, %s5, %s3
  // Predicated region
  $region2: #{conv_norm_forward.1} parent=0 // pred_check
    _
  $region3: #{conv_norm_forward.1} parent=0 // pred_check_branch
    %8 = sbr.rel (0) target = $region5
  $region4: #{conv_norm_forward.1} parent=0 // pred_region
    _
  $region5: #{conv_norm_forward.1} parent=0 // pred_fallthru
    _
  // Predicated region
  $region6: #{conv_norm_forward.1} parent=0 // pred_check
    _
  $region7: #{conv_norm_forward.1} parent=0 // pred_check_branch
    %10 = sbr.rel (0) target = $region9
  $region8: #{conv_norm_forward.1} parent=0 // pred_region
    _
  $region9: #{conv_norm_forward.1} parent=0 // pred_fallthru
    _
  %v11 = vld [vmem:[%s0] sm:$0xff]
  %v12 = vld [vmem:[%s1] sm:$0xff]
  %v13 = vld [vmem:[%s1 + $0x8] sm:$0xff]
  %v14 = vld [vmem:[%s1 + $0x10] sm:$0xff]
  %v15 = vld [vmem:[%s1 + $0x18] sm:$0xff]
  %v16 = vld [vmem:[%s1 + $0x20] sm:$0xff]
  %v17 = vld [vmem:[%s1 + $0x28] sm:$0xff]
  %v18 = vld [vmem:[%s1 + $0x30] sm:$0xff]
  %v19 = vld [vmem:[%s1 + $0x38] sm:$0xff]
  %v20 = vld [vmem:[%s1 + $0x40] sm:$0xff]
  %v21 = vld [vmem:[%s1 + $0x48] sm:$0xff]
  %v22 = vld [vmem:[%s1 + $0x50] sm:$0xff]
  %v23 = vld [vmem:[%s1 + $0x58] sm:$0xff]
  %v24 = vld [vmem:[%s1 + $0x60] sm:$0xff]
  %v25 = vld [vmem:[%s1 + $0x68] sm:$0xff]
  %v26 = vld [vmem:[%s1 + $0x70] sm:$0xff]
  %v27 = vld [vmem:[%s1 + $0x78] sm:$0xff]
  %v28 = vld [vmem:[%s1 + $0x80] sm:$0x1f]
  %v29 = vld [vmem:[%s1 + $0x88] sm:$0x1f]
  %v30 = vld [vmem:[%s1 + $0x90] sm:$0x1f]
  %v31 = vld [vmem:[%s1 + $0x98] sm:$0x1f]
  %vm32 = vcmask 302080
  %v34 = vsel %vm32, %v11, 0
  %vm36 = vcmask 1044480
  %v38 = vsel %vm36, %v28, 0
  %v41 = vsel %vm36, %v29, 0
  %v44 = vsel %vm36, %v30, 0
  %v47 = vsel %vm36, %v31, 0
  %49 = vmatpush.msra.mxu0 0.0
  %50 = vmatpush.msra.mxu0 0.0
  %51 = vmatpush.msra.mxu0 0.0
  %52 = vmatpush.msra.mxu0 0.0
  %53 = vmatpush.msra.mxu0 0.0
  %54 = vmatpush.msra.mxu0 0.0
  %55 = vmatpush.msra.mxu0 0.0
  %56 = vmatpush.msra.mxu0 0.0
  %57 = vmatpush.msra.mxu0 0.0
  %58 = vmatpush.msra.mxu0 0.0
  %59 = vmatpush.msra.mxu0 0.0
  %60 = vmatpush.msra.mxu0 %v38
  %61 = vmatpush.msra.mxu0 %v24
  %62 = vmatpush.msra.mxu0 %v20
  %63 = vmatpush.msra.mxu0 %v16
  %64 = vmatpush.msra.mxu0 %v12
  %65 = vmatmul.f32.gmra.mxu0 %v34
  %v66 = vpop.f32.mrf.mxu0
  %v67 = vadd.f32 0.0, %v66
  %68 = vdwg.mxu0
  %69 = vmatpush.msra.mxu0 0.0
  %70 = vmatpush.msra.mxu0 0.0
  %71 = vmatpush.msra.mxu0 0.0
  %72 = vmatpush.msra.mxu0 0.0
  %73 = vmatpush.msra.mxu0 0.0
  %74 = vmatpush.msra.mxu0 0.0
  %75 = vmatpush.msra.mxu0 0.0
  %76 = vmatpush.msra.mxu0 0.0
  %77 = vmatpush.msra.mxu0 0.0
  %78 = vmatpush.msra.mxu0 0.0
  %79 = vmatpush.msra.mxu0 0.0
  %80 = vmatpush.msra.mxu0 %v41
  %81 = vmatpush.msra.mxu0 %v25
  %82 = vmatpush.msra.mxu0 %v21
  %83 = vmatpush.msra.mxu0 %v17
  %84 = vmatpush.msra.mxu0 %v13
  %85 = vmatmul.f32.gmra.mxu0 %v34
  %v86 = vpop.f32.mrf.mxu0
  %v87 = vadd.f32 0.0, %v86
  %88 = vdwg.mxu0
  %89 = vmatpush.msra.mxu0 0.0
  %90 = vmatpush.msra.mxu0 0.0
  %91 = vmatpush.msra.mxu0 0.0
  %92 = vmatpush.msra.mxu0 0.0
  %93 = vmatpush.msra.mxu0 0.0
  %94 = vmatpush.msra.mxu0 0.0
  %95 = vmatpush.msra.mxu0 0.0
  %96 = vmatpush.msra.mxu0 0.0
  %97 = vmatpush.msra.mxu0 0.0
  %98 = vmatpush.msra.mxu0 0.0
  %99 = vmatpush.msra.mxu0 0.0
  %100 = vmatpush.msra.mxu0 %v44
  %101 = vmatpush.msra.mxu0 %v26
  %102 = vmatpush.msra.mxu0 %v22
  %103 = vmatpush.msra.mxu0 %v18
  %104 = vmatpush.msra.mxu0 %v14
  %105 = vmatmul.f32.gmra.mxu0 %v34
  %v106 = vpop.f32.mrf.mxu0
  %v107 = vadd.f32 0.0, %v106
  %108 = vdwg.mxu0
  %109 = vmatpush.msra.mxu0 0.0
  %110 = vmatpush.msra.mxu0 0.0
  %111 = vmatpush.msra.mxu0 0.0
  %112 = vmatpush.msra.mxu0 0.0
  %113 = vmatpush.msra.mxu0 0.0
  %114 = vmatpush.msra.mxu0 0.0
  %115 = vmatpush.msra.mxu0 0.0
  %116 = vmatpush.msra.mxu0 0.0
  %117 = vmatpush.msra.mxu0 0.0
  %118 = vmatpush.msra.mxu0 0.0
  %119 = vmatpush.msra.mxu0 0.0
  %120 = vmatpush.msra.mxu0 %v47
  %121 = vmatpush.msra.mxu0 %v27
  %122 = vmatpush.msra.mxu0 %v23
  %123 = vmatpush.msra.mxu0 %v19
  %124 = vmatpush.msra.mxu0 %v15
  %125 = vmatmul.f32.gmra.mxu0 %v34
  %v126 = vpop.f32.mrf.mxu0
  %v127 = vadd.f32 0.0, %v126
  %128 = vdwg.mxu0
  %v129 = vmax.f32 %v67, 0.0
  %v130 = vmax.f32 %v87, 0.0
  %v131 = vmax.f32 %v107, 0.0
  %v132 = vmax.f32 %v127, 0.0
  %133 = vst [vmem:[%s2] sm:$0xff] %v129
  %134 = vst [vmem:[%s2 + $0x8] sm:$0xff] %v130
  %135 = vst [vmem:[%s2 + $0x10] sm:$0xff] %v131
  %136 = vst [vmem:[%s2 + $0x18] sm:$0xff] %v132
  // Predicated region
  $region10: #{conv_norm_forward.1} parent=0 // pred_check
    _
  $region11: #{conv_norm_forward.1} parent=0 // pred_check_branch
    %138 = sbr.rel (0) target = $region13
  $region12: #{conv_norm_forward.1} parent=0 // pred_region
    _
  $region13: #{conv_norm_forward.1} parent=0 // pred_fallthru
    _
  // Predicated region
  $region14: #{conv_norm_forward.1} parent=0 // pred_check
    _
  $region15: #{conv_norm_forward.1} parent=0 // pred_check_branch
    %140 = sbr.rel (0) target = $region17
  $region16: #{conv_norm_forward.1} parent=0 // pred_region
    _
  $region17: #{conv_norm_forward.1} parent=0 // pred_fallthru
    _

</llo_original>
